<compile_context>
chip_gen: v7x
topology: tpu7x:2x2x1
jax: 0.10.0
libtpu: 0.0.40
codegen_flags: <defaults>
</compile_context>

<pallas_src>
import functools
import math

import jax
import jax.numpy as jnp
from jax import lax
from jax.experimental import pallas as pl
from jax.experimental.pallas import tpu as pltpu


# ----------------------------- fused linear kernel -----------------------------

def _fused_linear_kernel(*refs, op_sizes):
    # refs = (x_0..x_{nx-1}, w_0..w_{no-1}, b_0..b_{no-1}, o_0..o_{no-1})
    # x_i: (tm, d_in_i); w_j: (d_in, d_out) pre-transposed; b_j: (1, d_out_j)
    n_x = len(op_sizes)
    n_out = sum(op_sizes)
    x_refs = refs[:n_x]
    w_refs = refs[n_x:n_x + n_out]
    b_refs = refs[n_x + n_out:n_x + 2 * n_out]
    o_refs = refs[n_x + 2 * n_out:]
    j = 0
    for i, cnt in enumerate(op_sizes):
        x = x_refs[i][...]                      # load shared activation once
        for _ in range(cnt):
            y = jnp.dot(x, w_refs[j][...], preferred_element_type=jnp.float32)
            o_refs[j][...] = (y + b_refs[j][...]).astype(o_refs[j].dtype)
            j += 1


def fused_linears(ops, *, tile_m=512):
    """Compute x @ w + b for every (w, b) head of every op in ONE pallas_call.

    ops: list of (x, [(w, b), ...]) where x: (N, d_in) (same N for all ops),
         w: (d_in, d_out) pre-transposed, b: (d_out,).
    Returns a flat list of outputs (one per (w, b), in order).
    """
    xs = [x for x, _ in ops]
    op_sizes = tuple(len(wbs) for _, wbs in ops)
    ws = [w for _, wbs in ops for (w, _b) in wbs]
    bs_ = [b.reshape(1, -1) for _, wbs in ops for (_w, b) in wbs]

    n_rows = xs[0].shape[0]
    tm = min(tile_m, n_rows)
    grid = (pl.cdiv(n_rows, tm),)

    in_specs = []
    for x in xs:
        in_specs.append(pl.BlockSpec((tm, x.shape[1]), lambda i: (i, 0)))
    for w in ws:
        # Constant block index -> weight DMA'd once, VMEM-resident across tiles.
        in_specs.append(pl.BlockSpec(w.shape, lambda i: (0, 0)))
    for b in bs_:
        in_specs.append(pl.BlockSpec(b.shape, lambda i: (0, 0)))

    out_specs = [pl.BlockSpec((tm, w.shape[1]), lambda i: (i, 0)) for w in ws]
    out_shape = [jax.ShapeDtypeStruct((n_rows, w.shape[1]), xs[0].dtype)
                 for w in ws]

    outs = pl.pallas_call(
        functools.partial(_fused_linear_kernel, op_sizes=op_sizes),
        grid=grid,
        in_specs=in_specs,
        out_specs=out_specs,
        out_shape=out_shape,
        compiler_params=pltpu.CompilerParams(
            dimension_semantics=("parallel",)),
    )(*xs, *ws, *bs_)
    return list(outs)


# ----------------------------- flash attention kernel -----------------------------

def _moh_flash_attn_kernel(route_ref, q_ref, k_ref, v_ref, o_ref,
                           m_ref, l_ref, acc_ref, *,
                           n_heads, d_k, seq_len, zero_pad, approx_recip):
    # route_ref: (bs, n_heads) f32 in SMEM (scalar prefetch)
    # q_ref/o_ref: (tq, d_model), k_ref/v_ref: (tk, d_model) VMEM blocks
    # m_ref/l_ref: (tq, n_heads) f32, acc_ref: (tq, d_model) f32 scratch
    b = pl.program_id(0)
    qi = pl.program_id(1)
    ki = pl.program_id(2)
    n_kv = pl.num_programs(2)

    tq = q_ref.shape[0]
    tk = k_ref.shape[0]
    q_start = qi * tq
    kv_start = ki * tk

    @pl.when(ki == 0)
    def _init():
        m_ref[...] = jnp.full(m_ref.shape, -1e30, jnp.float32)
        l_ref[...] = jnp.zeros(l_ref.shape, jnp.float32)
        acc_ref[...] = jnp.zeros(acc_ref.shape, jnp.float32)

    # Skip KV tiles fully above the causal diagonal -- except when zero_pad and
    # this q-tile contains global row 0 (its scores are 0 over the full seq).
    do_compute = kv_start <= q_start + (tq - 1)
    if zero_pad:
        do_compute = jnp.logical_or(do_compute, qi == 0)

    @pl.when(do_compute)
    def _compute():
        rows = lax.broadcasted_iota(jnp.int32, (tq, 1), 0) + q_start   # global q row
        cols = lax.broadcasted_iota(jnp.int32, (1, tk), 1) + kv_start  # global kv col
        valid = cols < seq_len                       # guard grid padding columns
        keep = jnp.logical_and(rows >= cols, valid)  # causal & in-range
        neg = jnp.float32(-1e9)

        for hh in range(n_heads):                    # static unroll; h is small
            sl = slice(hh * d_k, (hh + 1) * d_k)
            qh = q_ref[:, sl]                        # 1/sqrt(d_k) already folded in
            kh = k_ref[:, sl]
            vh = v_ref[:, sl]

            # Contract d_k of q with d_k of k -- no explicit K transpose.
            s = lax.dot_general(qh, kh,
                                dimension_numbers=(((1,), (1,)), ((), ())),
                                preferred_element_type=jnp.float32)
            s = jnp.where(keep, s, neg)
            if zero_pad:
                # torch: scores row 0 replaced by zeros PRE-softmax (after mask),
                # so row 0's softmax is uniform over the whole sequence.
                s = jnp.where(jnp.logical_and(rows == 0, valid),
                              jnp.float32(0.0), s)

            m_prev = m_ref[:, hh:hh + 1]
            l_prev = l_ref[:, hh:hh + 1]
            m_new = jnp.maximum(m_prev, jnp.max(s, axis=-1, keepdims=True))
            alpha = jnp.exp(m_prev - m_new)
            p = jnp.exp(s - m_new)
            l_ref[:, hh:hh + 1] = alpha * l_prev + jnp.sum(p, axis=-1, keepdims=True)
            acc_ref[:, sl] = alpha * acc_ref[:, sl] + jnp.dot(
                p.astype(vh.dtype), vh, preferred_element_type=jnp.float32)
            m_ref[:, hh:hh + 1] = m_new

    @pl.when(ki == n_kv - 1)
    def _finalize():
        # Normalize + apply the per-(batch, head) routing scale in the scratch
        # accumulator, then do one lane-dense (tq, d_model) store.
        for hh in range(n_heads):
            sl = slice(hh * d_k, (hh + 1) * d_k)
            inv_l = pl.reciprocal(l_ref[:, hh:hh + 1], approx=approx_recip)
            acc_ref[:, sl] = acc_ref[:, sl] * (inv_l * route_ref[b, hh])
        o_ref[...] = acc_ref[...].astype(o_ref.dtype)


def moh_attention_core(qp, kp, vp, routing_scale, *, n_heads, d_k, zero_pad,
                       tq=128, tk=128):
    """qp/kp/vp: (bs, seq, n_heads*d_k) in natural (batch, seq, feature) layout
    (no head transposes); routing_scale: (bs, n_heads) f32."""
    bs, seq, d_model = qp.shape
    tq = min(tq, seq)
    tk = min(tk, seq)
    n_q = pl.cdiv(seq, tq)
    n_kv = pl.cdiv(seq, tk)
    approx_recip = bool(qp.dtype == jnp.bfloat16)   # exact recip for f32 outputs

    kernel = functools.partial(_moh_flash_attn_kernel, n_heads=n_heads, d_k=d_k,
                               seq_len=seq, zero_pad=zero_pad,
                               approx_recip=approx_recip)
    q_blk = lambda b, qi, ki, route: (b, qi, 0)
    kv_blk = lambda b, qi, ki, route: (b, ki, 0)

    return pl.pallas_call(
        kernel,
        out_shape=jax.ShapeDtypeStruct((bs, seq, d_model), qp.dtype),
        grid_spec=pltpu.PrefetchScalarGridSpec(
            num_scalar_prefetch=1,               # routing scales live in SMEM
            grid=(bs, n_q, n_kv),                # KV/reduction axis last
            in_specs=[
                pl.BlockSpec((None, tq, d_model), q_blk),
                pl.BlockSpec((None, tk, d_model), kv_blk),
                pl.BlockSpec((None, tk, d_model), kv_blk),
            ],
            out_specs=pl.BlockSpec((None, tq, d_model), q_blk),
            scratch_shapes=[
                pltpu.VMEM((tq, n_heads), jnp.float32),   # running max
                pltpu.VMEM((tq, n_heads), jnp.float32),   # running denom
                pltpu.VMEM((tq, d_model), jnp.float32),   # context accumulator
            ],
        ),
        compiler_params=pltpu.CompilerParams(
            dimension_semantics=("parallel", "parallel", "arbitrary")),
    )(routing_scale.astype(jnp.float32), qp, kp, vp)


# ----------------------------- routing glue -----------------------------

def routing_from_logits(logits, bs, seq, n_heads, n_shared, n_selected):
    """Dynamic routing mode. logits: (bs*seq, n_heads - n_shared)."""
    nd = n_heads - n_shared
    gates = jax.nn.softmax(logits.astype(jnp.float32), axis=-1)
    _, idx = lax.top_k(gates, n_selected)
    dyn_mask = jnp.max(jax.nn.one_hot(idx, nd, dtype=gates.dtype), axis=1)
    dyn = (gates * dyn_mask).reshape(bs, seq, nd)
    shared = jnp.ones((bs, seq, n_shared), gates.dtype)
    routing = jnp.concatenate([shared, dyn], axis=-1)   # (bs, seq, n_heads)
    return routing.mean(axis=1)                         # (bs, n_heads)


# ----------------------------- param prep (once, outside hot path) -----------

def prepare_params(params, *, d_k, kq_same):
    """Pre-transposes all weights to (d_in, d_out), folds the routing gate into
    the q projection:
        gate(x) = (x @ wq.T + bq) @ wg.T = x @ (wg @ wq).T + wg @ bq
    and folds the 1/sqrt(d_k) score scale into the q projection (d_k**-0.25 on
    q when kq_same so q.k still carries d_k**-0.5)."""
    wq, bq = params["wq"], params["bq"]     # torch (d_out, d_in) layout
    wg = params["wg"]                       # (nd, d_model), no bias
    wg_eff = wg @ wq                        # uses the UNSCALED q projection
    bg_eff = wg @ bq
    q_scale = d_k ** (-0.25) if kq_same else d_k ** (-0.5)
    prep = {
        "wq_t": (wq * q_scale).T, "bq": bq * q_scale,
        "wg_t": wg_eff.T, "bg": bg_eff,
        "wv_t": params["wv"].T, "bv": params["bv"],
        "wo_t": params["wo"].T, "bo": params["bo"],
    }
    if not kq_same:
        prep["wk_t"] = params["wk"].T
        prep["bk"] = params["bk"]
    return prep


# ----------------------------- full forward -----------------------------

def moh_attention_forward(prep, q, k, v, *, n_heads, n_shared, n_selected,
                          d_k, kq_same, zero_pad, tq=128, tk=128):
    bs, seq, d_model = q.shape
    q2 = q.reshape(bs * seq, d_model)
    v2 = v.reshape(bs * seq, d_model)

    # One pallas_call for every input projection; q projection and routing-gate
    # logits come out as two separate lane-dense outputs (no slicing after).
    if kq_same:
        ops = [(q2, [(prep["wq_t"], prep["bq"]), (prep["wg_t"], prep["bg"])]),
               (v2, [(prep["wv_t"], prep["bv"])])]
        qp, logits, vp = fused_linears(ops)
        kp = qp                                   # reuse q projection as K
    else:
        k2 = k.reshape(bs * seq, d_model)
        ops = [(q2, [(prep["wq_t"], prep["bq"]), (prep["wg_t"], prep["bg"])]),
               (k2, [(prep["wk_t"], prep["bk"])]),
               (v2, [(prep["wv_t"], prep["bv"])])]
        qp, logits, kp, vp = fused_linears(ops)

    routing_scale = routing_from_logits(logits, bs, seq,
                                        n_heads, n_shared, n_selected)

    ctx = moh_attention_core(qp.reshape(bs, seq, d_model),
                             kp.reshape(bs, seq, d_model),
                             vp.reshape(bs, seq, d_model),
                             routing_scale,
                             n_heads=n_heads, d_k=d_k, zero_pad=zero_pad,
                             tq=tq, tk=tk)

    (out2,) = fused_linears([(ctx.reshape(bs * seq, d_model),
                              [(prep["wo_t"], prep["bo"])])])
    return out2.reshape(bs, seq, d_model)


# ----------------------------- pure-JAX reference -----------------------------

def reference_forward(params, q, k, v, mask, *, n_heads, n_shared, n_selected,
                      d_k, kq_same, zero_pad):
    bs, seq, d_model = q.shape
    lin = lambda x, w, b: x @ w.T + b
    qp = lin(q, params["wq"], params["bq"])
    kp = qp if kq_same else lin(k, params["wk"], params["bk"])
    vp = lin(v, params["wv"], params["bv"])

    qh = qp.reshape(bs, seq, n_heads, d_k).transpose(0, 2, 1, 3)
    kh = kp.reshape(bs, seq, n_heads, d_k).transpose(0, 2, 1, 3)
    vh = vp.reshape(bs, seq, n_heads, d_k).transpose(0, 2, 1, 3)

    scores = jnp.einsum("bhqd,bhkd->bhqk", qh, kh) / math.sqrt(d_k)
    scores = jnp.where(mask == 0, -1e9, scores)
    if zero_pad:
        scores = scores.at[:, :, 0, :].set(0.0)

    nd = n_heads - n_shared
    logits = qp.reshape(bs * seq, d_model) @ params["wg"].T
    gates = jax.nn.softmax(logits, axis=1)
    _, idx = lax.top_k(gates, n_selected)
    dyn_mask = jnp.max(jax.nn.one_hot(idx, nd, dtype=gates.dtype), axis=1)
    dyn = (gates * dyn_mask).reshape(bs, seq, nd)
    routing = jnp.concatenate([jnp.ones((bs, seq, n_shared)), dyn], axis=-1)
    routing_mask = routing.mean(axis=1)[:, :, None, None]          # (bs,h,1,1)

    attn = jax.nn.softmax(scores, axis=-1)
    ctx = jnp.einsum("bhqk,bhkd->bhqd", attn, vh) * routing_mask
    ctx = ctx.transpose(0, 2, 1, 3).reshape(bs, seq, d_model)
    return lin(ctx, params["wo"], params["bo"])


# ----------------------------- test harness -----------------------------

def run_case(name, *, bs, seq, d_model, n_heads, d_k, n_shared, n_selected,
             kq_same, zero_pad, tq, tk, seed, tol):
    key = jax.random.PRNGKey(seed)
    keys = jax.random.split(key, 16)

    def xavier(kk, shape):
        fan_out, fan_in = shape
        bound = math.sqrt(6.0 / (fan_in + fan_out))
        return jax.random.uniform(kk, shape, jnp.float32, -bound, bound)

    params = {
        "wq": xavier(keys[0], (d_model, d_model)),
        "bq": 0.1 * jax.random.normal(keys[8], (d_model,), jnp.float32),
        "wk": xavier(keys[1], (d_model, d_model)),
        "bk": 0.1 * jax.random.normal(keys[9], (d_model,), jnp.float32),
        "wv": xavier(keys[2], (d_model, d_model)),
        "bv": 0.1 * jax.random.normal(keys[10], (d_model,), jnp.float32),
        "wo": xavier(keys[3], (d_model, d_model)),
        "bo": 0.1 * jax.random.normal(keys[11], (d_model,), jnp.float32),
        "wg": xavier(keys[4], (n_heads - n_shared, d_model)),
    }

    q = jax.random.normal(keys[5], (bs, seq, d_model), jnp.float32)
    k = jax.random.normal(keys[6], (bs, seq, d_model), jnp.float32)
    v = jax.random.normal(keys[7], (bs, seq, d_model), jnp.float32)
    mask = jnp.tril(jnp.ones((seq, seq), jnp.int32)).reshape(1, 1, seq, seq)

    prep = prepare_params(params, d_k=d_k, kq_same=kq_same)
    out = moh_attention_forward(prep, q, k, v,
                                n_heads=n_heads, n_shared=n_shared,
                                n_selected=n_selected, d_k=d_k,
                                kq_same=kq_same, zero_pad=zero_pad,
                                tq=tq, tk=tk)
    out = jax.block_until_ready(out)

    ref = reference_forward(params, q, k, v, mask,
                            n_heads=n_heads, n_shared=n_shared,
                            n_selected=n_selected, d_k=d_k,
                            kq_same=kq_same, zero_pad=zero_pad)
    err = float(jnp.max(jnp.abs(out - ref)))
    assert err < tol, f"{name}: mismatch vs reference: {err}"
    return err


if __name__ == "__main__":
    # Tiny config (module-consistent small shapes), kq_same=False.
    run_case("tiny", bs=2, seq=8, d_model=32, n_heads=4, d_k=8,
             n_shared=2, n_selected=1, kq_same=False, zero_pad=True,
             tq=128, tk=128, seed=0, tol=2e-3)
    # Moderate config exercising the multi-tile flash path + kq_same + zero_pad.
    run_case("tiled", bs=2, seq=256, d_model=128, n_heads=4, d_k=32,
             n_shared=2, n_selected=2, kq_same=True, zero_pad=True,
             tq=128, tk=128, seed=0, tol=2e-3)
    print("KERNEL_OK")
</pallas_src>

<mosaic_0001>
module attributes {stable_mosaic.version = 11 : i64} {
  func.func @_fused_linear_kernel(%arg0: i32, %arg1: memref<16x32xf32, #tpu.memory_space<vmem>>, %arg2: memref<16x32xf32, #tpu.memory_space<vmem>>, %arg3: memref<16x32xf32, #tpu.memory_space<vmem>>, %arg4: memref<32x32xf32, #tpu.memory_space<vmem>>, %arg5: memref<32x2xf32, #tpu.memory_space<vmem>>, %arg6: memref<32x32xf32, #tpu.memory_space<vmem>>, %arg7: memref<32x32xf32, #tpu.memory_space<vmem>>, %arg8: memref<1x32xf32, #tpu.memory_space<vmem>>, %arg9: memref<1x2xf32, #tpu.memory_space<vmem>>, %arg10: memref<1x32xf32, #tpu.memory_space<vmem>>, %arg11: memref<1x32xf32, #tpu.memory_space<vmem>>, %arg12: memref<16x32xf32, #tpu.memory_space<vmem>>, %arg13: memref<16x2xf32, #tpu.memory_space<vmem>>, %arg14: memref<16x32xf32, #tpu.memory_space<vmem>>, %arg15: memref<16x32xf32, #tpu.memory_space<vmem>>) attributes {dimension_semantics = [#tpu.dimension_semantics<parallel>], iteration_bounds = array<i64: 1>, scalar_prefetch = 0 : i64, scratch_operands = 0 : i64, tpu.core_type = #tpu.core_type<tc>, window_params = [{transform_indices = @transform_0, window_bounds = array<i64: 16, 32>}, {transform_indices = @transform_1, window_bounds = array<i64: 16, 32>}, {transform_indices = @transform_2, window_bounds = array<i64: 16, 32>}, {pipeline_mode = #tpu.pipeline_mode<synchronous>, transform_indices = @transform_3, window_bounds = array<i64: 32, 32>}, {pipeline_mode = #tpu.pipeline_mode<synchronous>, transform_indices = @transform_4, window_bounds = array<i64: 32, 2>}, {pipeline_mode = #tpu.pipeline_mode<synchronous>, transform_indices = @transform_5, window_bounds = array<i64: 32, 32>}, {pipeline_mode = #tpu.pipeline_mode<synchronous>, transform_indices = @transform_6, window_bounds = array<i64: 32, 32>}, {pipeline_mode = #tpu.pipeline_mode<synchronous>, transform_indices = @transform_7, window_bounds = array<i64: 1, 32>}, {pipeline_mode = #tpu.pipeline_mode<synchronous>, transform_indices = @transform_8, window_bounds = array<i64: 1, 2>}, {pipeline_mode = #tpu.pipeline_mode<synchronous>, transform_indices = @transform_9, window_bounds = array<i64: 1, 32>}, {pipeline_mode = #tpu.pipeline_mode<synchronous>, transform_indices = @transform_10, window_bounds = array<i64: 1, 32>}, {transform_indices = @transform_11, window_bounds = array<i64: 16, 32>}, {transform_indices = @transform_12, window_bounds = array<i64: 16, 2>}, {transform_indices = @transform_13, window_bounds = array<i64: 16, 32>}, {transform_indices = @transform_14, window_bounds = array<i64: 16, 32>}]} {
    %c0 = arith.constant 0 : index
    %c0_0 = arith.constant 0 : index
    %0 = vector.load %arg1[%c0, %c0_0] : memref<16x32xf32, #tpu.memory_space<vmem>>, vector<16x32xf32>
    %c0_1 = arith.constant 0 : index
    %c0_2 = arith.constant 0 : index
    %1 = vector.load %arg4[%c0_1, %c0_2] : memref<32x32xf32, #tpu.memory_space<vmem>>, vector<32x32xf32>
    %cst = arith.constant dense<0.000000e+00> : vector<16x32xf32>
    %2 = tpu.matmul %0, %1, %cst {dimension_numbers = #tpu.dot_dimension_numbers<[1], [0], [0], [1], [0, 0, 1, 1], [], []>} : vector<16x32xf32>, vector<32x32xf32>, vector<16x32xf32> -> vector<16x32xf32>
    %c0_3 = arith.constant 0 : index
    %c0_4 = arith.constant 0 : index
    %3 = vector.load %arg8[%c0_3, %c0_4] : memref<1x32xf32, #tpu.memory_space<vmem>>, vector<1x32xf32>
    %4 = vector.broadcast %3 : vector<1x32xf32> to vector<16x32xf32>
    %5 = arith.addf %2, %4 : vector<16x32xf32>
    %c0_5 = arith.constant 0 : index
    %c0_6 = arith.constant 0 : index
    %6 = vector.load %arg12[%c0_5, %c0_6] : memref<16x32xf32, #tpu.memory_space<vmem>>, vector<16x32xf32>
    tpu.vector_store %arg12[%c0_5, %c0_6], %5 {strides = array<i32>} : memref<16x32xf32, #tpu.memory_space<vmem>>, vector<16x32xf32>,
    %c0_7 = arith.constant 0 : index
    %c0_8 = arith.constant 0 : index
    %7 = vector.load %arg5[%c0_7, %c0_8] : memref<32x2xf32, #tpu.memory_space<vmem>>, vector<32x2xf32>
    %cst_9 = arith.constant dense<0.000000e+00> : vector<16x2xf32>
    %8 = tpu.matmul %0, %7, %cst_9 {dimension_numbers = #tpu.dot_dimension_numbers<[1], [0], [0], [1], [0, 0, 1, 1], [], []>} : vector<16x32xf32>, vector<32x2xf32>, vector<16x2xf32> -> vector<16x2xf32>
    %c0_10 = arith.constant 0 : index
    %c0_11 = arith.constant 0 : index
    %9 = vector.load %arg9[%c0_10, %c0_11] : memref<1x2xf32, #tpu.memory_space<vmem>>, vector<1x2xf32>
    %10 = vector.broadcast %9 : vector<1x2xf32> to vector<16x2xf32>
    %11 = arith.addf %8, %10 : vector<16x2xf32>
    %c0_12 = arith.constant 0 : index
    %c0_13 = arith.constant 0 : index
    %12 = vector.load %arg13[%c0_12, %c0_13] : memref<16x2xf32, #tpu.memory_space<vmem>>, vector<16x2xf32>
    tpu.vector_store %arg13[%c0_12, %c0_13], %11 {strides = array<i32>} : memref<16x2xf32, #tpu.memory_space<vmem>>, vector<16x2xf32>,
    %c0_14 = arith.constant 0 : index
    %c0_15 = arith.constant 0 : index
    %13 = vector.load %arg2[%c0_14, %c0_15] : memref<16x32xf32, #tpu.memory_space<vmem>>, vector<16x32xf32>
    %c0_16 = arith.constant 0 : index
    %c0_17 = arith.constant 0 : index
    %14 = vector.load %arg6[%c0_16, %c0_17] : memref<32x32xf32, #tpu.memory_space<vmem>>, vector<32x32xf32>
    %cst_18 = arith.constant dense<0.000000e+00> : vector<16x32xf32>
    %15 = tpu.matmul %13, %14, %cst_18 {dimension_numbers = #tpu.dot_dimension_numbers<[1], [0], [0], [1], [0, 0, 1, 1], [], []>} : vector<16x32xf32>, vector<32x32xf32>, vector<16x32xf32> -> vector<16x32xf32>
    %c0_19 = arith.constant 0 : index
    %c0_20 = arith.constant 0 : index
    %16 = vector.load %arg10[%c0_19, %c0_20] : memref<1x32xf32, #tpu.memory_space<vmem>>, vector<1x32xf32>
    %17 = vector.broadcast %16 : vector<1x32xf32> to vector<16x32xf32>
    %18 = arith.addf %15, %17 : vector<16x32xf32>
    %c0_21 = arith.constant 0 : index
    %c0_22 = arith.constant 0 : index
    %19 = vector.load %arg14[%c0_21, %c0_22] : memref<16x32xf32, #tpu.memory_space<vmem>>, vector<16x32xf32>
    tpu.vector_store %arg14[%c0_21, %c0_22], %18 {strides = array<i32>} : memref<16x32xf32, #tpu.memory_space<vmem>>, vector<16x32xf32>,
    %c0_23 = arith.constant 0 : index
    %c0_24 = arith.constant 0 : index
    %20 = vector.load %arg3[%c0_23, %c0_24] : memref<16x32xf32, #tpu.memory_space<vmem>>, vector<16x32xf32>
    %c0_25 = arith.constant 0 : index
    %c0_26 = arith.constant 0 : index
    %21 = vector.load %arg7[%c0_25, %c0_26] : memref<32x32xf32, #tpu.memory_space<vmem>>, vector<32x32xf32>
    %cst_27 = arith.constant dense<0.000000e+00> : vector<16x32xf32>
    %22 = tpu.matmul %20, %21, %cst_27 {dimension_numbers = #tpu.dot_dimension_numbers<[1], [0], [0], [1], [0, 0, 1, 1], [], []>} : vector<16x32xf32>, vector<32x32xf32>, vector<16x32xf32> -> vector<16x32xf32>
    %c0_28 = arith.constant 0 : index
    %c0_29 = arith.constant 0 : index
    %23 = vector.load %arg11[%c0_28, %c0_29] : memref<1x32xf32, #tpu.memory_space<vmem>>, vector<1x32xf32>
    %24 = vector.broadcast %23 : vector<1x32xf32> to vector<16x32xf32>
    %25 = arith.addf %22, %24 : vector<16x32xf32>
    %c0_30 = arith.constant 0 : index
    %c0_31 = arith.constant 0 : index
    %26 = vector.load %arg15[%c0_30, %c0_31] : memref<16x32xf32, #tpu.memory_space<vmem>>, vector<16x32xf32>
    tpu.vector_store %arg15[%c0_30, %c0_31], %25 {strides = array<i32>} : memref<16x32xf32, #tpu.memory_space<vmem>>, vector<16x32xf32>,
    return
  }
  func.func @transform_0(%arg0: i32) -> (i32, i32) {
    %c0_i32 = arith.constant 0 : i32
    %c0_i32_0 = arith.constant 0 : i32
    return %arg0, %c0_i32 : i32, i32
  }
  func.func @transform_1(%arg0: i32) -> (i32, i32) {
    %c0_i32 = arith.constant 0 : i32
    %c0_i32_0 = arith.constant 0 : i32
    return %arg0, %c0_i32 : i32, i32
  }
  func.func @transform_2(%arg0: i32) -> (i32, i32) {
    %c0_i32 = arith.constant 0 : i32
    %c0_i32_0 = arith.constant 0 : i32
    return %arg0, %c0_i32 : i32, i32
  }
  func.func @transform_3(%arg0: i32) -> (i32, i32) {
    %c0_i32 = arith.constant 0 : i32
    %c0_i32_0 = arith.constant 0 : i32
    %c0_i32_1 = arith.constant 0 : i32
    return %c0_i32, %c0_i32_0 : i32, i32
  }
  func.func @transform_4(%arg0: i32) -> (i32, i32) {
    %c0_i32 = arith.constant 0 : i32
    %c0_i32_0 = arith.constant 0 : i32
    %c0_i32_1 = arith.constant 0 : i32
    return %c0_i32, %c0_i32_0 : i32, i32
  }
  func.func @transform_5(%arg0: i32) -> (i32, i32) {
    %c0_i32 = arith.constant 0 : i32
    %c0_i32_0 = arith.constant 0 : i32
    %c0_i32_1 = arith.constant 0 : i32
    return %c0_i32, %c0_i32_0 : i32, i32
  }
  func.func @transform_6(%arg0: i32) -> (i32, i32) {
    %c0_i32 = arith.constant 0 : i32
    %c0_i32_0 = arith.constant 0 : i32
    %c0_i32_1 = arith.constant 0 : i32
    return %c0_i32, %c0_i32_0 : i32, i32
  }
  func.func @transform_7(%arg0: i32) -> (i32, i32) {
    %c0_i32 = arith.constant 0 : i32
    %c0_i32_0 = arith.constant 0 : i32
    %c0_i32_1 = arith.constant 0 : i32
    return %c0_i32, %c0_i32_0 : i32, i32
  }
  func.func @transform_8(%arg0: i32) -> (i32, i32) {
    %c0_i32 = arith.constant 0 : i32
    %c0_i32_0 = arith.constant 0 : i32
    %c0_i32_1 = arith.constant 0 : i32
    return %c0_i32, %c0_i32_0 : i32, i32
  }
  func.func @transform_9(%arg0: i32) -> (i32, i32) {
    %c0_i32 = arith.constant 0 : i32
    %c0_i32_0 = arith.constant 0 : i32
    %c0_i32_1 = arith.constant 0 : i32
    return %c0_i32, %c0_i32_0 : i32, i32
  }
  func.func @transform_10(%arg0: i32) -> (i32, i32) {
    %c0_i32 = arith.constant 0 : i32
    %c0_i32_0 = arith.constant 0 : i32
    %c0_i32_1 = arith.constant 0 : i32
    return %c0_i32, %c0_i32_0 : i32, i32
  }
  func.func @transform_11(%arg0: i32) -> (i32, i32) {
    %c0_i32 = arith.constant 0 : i32
    %c0_i32_0 = arith.constant 0 : i32
    return %arg0, %c0_i32 : i32, i32
  }
  func.func @transform_12(%arg0: i32) -> (i32, i32) {
    %c0_i32 = arith.constant 0 : i32
    %c0_i32_0 = arith.constant 0 : i32
    return %arg0, %c0_i32 : i32, i32
  }
  func.func @transform_13(%arg0: i32) -> (i32, i32) {
    %c0_i32 = arith.constant 0 : i32
    %c0_i32_0 = arith.constant 0 : i32
    return %arg0, %c0_i32 : i32, i32
  }
  func.func @transform_14(%arg0: i32) -> (i32, i32) {
    %c0_i32 = arith.constant 0 : i32
    %c0_i32_0 = arith.constant 0 : i32
    return %arg0, %c0_i32 : i32, i32
  }
}

</mosaic_0001>

<llo_original>
// kernel: tpu_custom_call.1
$region0: #{tpu_custom_call.1}
  #allocation0 [shape = 'u32[]', space=smem, size = 0x4, offset = 0x4, fixed_abs, tag = 'smem constant byte address 0x4 - core index']
  #allocation1 [shape = 'u32[144,128]{1,0:T(1,128)}', space=vmem, size = 0x12000, scoped, tag = 'internal scratch']
  %s0 = inlined_call_operand.hbm [shape: f32[16,32], index: 0, kind: input, shape index: {}]
  %s1 = inlined_call_operand.hbm [shape: f32[16,32], index: 1, kind: input, shape index: {}]
  %s2 = inlined_call_operand.hbm [shape: f32[16,32], index: 2, kind: input, shape index: {}]
  %s3 = inlined_call_operand.vmem [shape: f32[32,32], index: 3, kind: input, shape index: {}]
  %s4 = inlined_call_operand.vmem [shape: f32[32,2], index: 4, kind: input, shape index: {}]
  %s5 = inlined_call_operand.hbm [shape: f32[32,32], index: 5, kind: input, shape index: {}]
  %s6 = inlined_call_operand.hbm [shape: f32[32,32], index: 6, kind: input, shape index: {}]
  %s7 = inlined_call_operand.vmem [shape: f32[1,32], index: 7, kind: input, shape index: {}]
  %s8 = inlined_call_operand.vmem [shape: f32[1,2], index: 8, kind: input, shape index: {}]
  %s9 = inlined_call_operand.vmem [shape: f32[1,32], index: 9, kind: input, shape index: {}]
  %s10 = inlined_call_operand.vmem [shape: f32[1,32], index: 10, kind: input, shape index: {}]
  %s11 = inlined_call_operand.hbm [shape: f32[16,32], index: 11, kind: output, shape index: {0}]
  %s12 = inlined_call_operand.vmem [shape: f32[16,2], index: 12, kind: output, shape index: {1}]
  %s13 = inlined_call_operand.hbm [shape: f32[16,32], index: 13, kind: output, shape index: {2}]
  %s14 = inlined_call_operand.hbm [shape: f32[16,32], index: 14, kind: output, shape index: {3}]
  %15 = xla_tuple %s11, %s12, %s13, %s14
  %s16 = sld [smem:[#allocation0]]
  $region98: #{tpu_custom_call.1} parent=0
    _
  %s18 = ssub.s32 1, %s16
  %s19 = scalar_select 0, %s18, %s16
  $region1: #{tpu_custom_call.1} parent=0
    #allocation2 [shape = 'u8[8192]{0}', space=vmem, size = 0x2000, scoped, tag = 'input window, operand 0, single buffered']
    #allocation3 [shape = 's32[1]{0}', space=sflag, size = 0x4, scoped, tag = 'scoped memory for tpu_custom_call.1']
    #allocation4 [shape = 's32[1]{0}', space=sflag, size = 0x4, scoped, tag = 'scoped memory for tpu_custom_call.1']
    #allocation5 [shape = 'u8[8192]{0}', space=vmem, size = 0x2000, scoped, tag = 'input window, operand 1, single buffered']
    #allocation6 [shape = 's32[1]{0}', space=sflag, size = 0x4, scoped, tag = 'scoped memory for tpu_custom_call.1']
    #allocation7 [shape = 'u8[8192]{0}', space=vmem, size = 0x2000, scoped, tag = 'input window, operand 2, single buffered']
    #allocation8 [shape = 'u8[16384]{0}', space=vmem, size = 0x4000, scoped, tag = 'input window, operand 5, single buffered']
    #allocation9 [shape = 's32[1]{0}', space=sflag, size = 0x4, scoped, tag = 'scoped memory for tpu_custom_call.1']
    #allocation10 [shape = 'u8[16384]{0}', space=vmem, size = 0x4000, scoped, tag = 'input window, operand 6, single buffered']
    #allocation11 [shape = 'u8[8192]{0}', space=vmem, size = 0x2000, scoped, tag = 'output window, operand 0, single buffered']
    #allocation12 [shape = 'u8[8192]{0}', space=vmem, size = 0x2000, scoped, tag = 'output window, operand 2, single buffered']
    #allocation13 [shape = 's32[1]{0}', space=sflag, size = 0x4, scoped, tag = 'scoped memory for tpu_custom_call.1']
    #allocation14 [shape = 'u8[8192]{0}', space=vmem, size = 0x2000, scoped, tag = 'output window, operand 3, single buffered']
    %20 = vsyncpa [#allocation3], 0
    %21 = vsyncpa [#allocation6], 0
    %22 = vsyncpa [#allocation9], 0
    %23 = vsyncpa [#allocation4], 0
    %24 = vsyncpa [#allocation13], 0
    // Predicated region
    $region2: #{tpu_custom_call.1} parent=1 // pred_check
      _
    $region3: #{tpu_custom_call.1} parent=1 // pred_check_branch
      %26 = sbr.rel (0) target = $region5
    $region4: #{tpu_custom_call.1} parent=1 // pred_region
      %s28 = ssub.s32 256, 256
      %29 = vsyncadd [#allocation3], %s28
      %s30 = sshll.u32 [#allocation2], 4
      %s31 = int_to_ptr.vmem [resolvable:$true] %s30
      %36 = dma.hbm_to_vmem [thread:$0]  %s0, 256, %s31, [#allocation3], 128, 128, 8
    $region5: #{tpu_custom_call.1} parent=1 // pred_fallthru
      _
    // Predicated region
    $region6: #{tpu_custom_call.1} parent=1 // pred_check
      _
    $region7: #{tpu_custom_call.1} parent=1 // pred_check_branch
      %38 = sbr.rel (0) target = $region9
    $region8: #{tpu_custom_call.1} parent=1 // pred_region
      %s40 = ssub.s32 256, 256
      %41 = vsyncadd [#allocation6], %s40
      %s42 = sshll.u32 [#allocation5], 4
      %s43 = int_to_ptr.vmem [resolvable:$true] %s42
      %48 = dma.hbm_to_vmem [thread:$0]  %s1, 256, %s43, [#allocation6], 128, 128, 8
    $region9: #{tpu_custom_call.1} parent=1 // pred_fallthru
      _
    // Predicated region
    $region10: #{tpu_custom_call.1} parent=1 // pred_check
      _
    $region11: #{tpu_custom_call.1} parent=1 // pred_check_branch
      %50 = sbr.rel (0) target = $region13
    $region12: #{tpu_custom_call.1} parent=1 // pred_region
      %s52 = ssub.s32 256, 256
      %53 = vsyncadd [#allocation6], %s52
      %s54 = sshll.u32 [#allocation7], 4
      %s55 = int_to_ptr.vmem [resolvable:$true] %s54
      %60 = dma.hbm_to_vmem [thread:$0]  %s2, 256, %s55, [#allocation6], 128, 128, 8
    $region13: #{tpu_custom_call.1} parent=1 // pred_fallthru
      _
    // Predicated region
    $region14: #{tpu_custom_call.1} parent=1 // pred_check
      _
    $region15: #{tpu_custom_call.1} parent=1 // pred_check_branch
      %62 = sbr.rel (0) target = $region17
    $region16: #{tpu_custom_call.1} parent=1 // pred_region
      _
    $region17: #{tpu_custom_call.1} parent=1 // pred_fallthru
      _
    // Predicated region
    $region18: #{tpu_custom_call.1} parent=1 // pred_check
      _
    $region19: #{tpu_custom_call.1} parent=1 // pred_check_branch
      %64 = sbr.rel (0) target = $region21
    $region20: #{tpu_custom_call.1} parent=1 // pred_region
      _
    $region21: #{tpu_custom_call.1} parent=1 // pred_fallthru
      _
    // Predicated region
    $region22: #{tpu_custom_call.1} parent=1 // pred_check
      _
    $region23: #{tpu_custom_call.1} parent=1 // pred_check_branch
      %66 = sbr.rel (0) target = $region25
    $region24: #{tpu_custom_call.1} parent=1 // pred_region
      %s68 = ssub.s32 512, 512
      %69 = vsyncadd [#allocation9], %s68
      %s70 = sshll.u32 [#allocation8], 4
      %s71 = int_to_ptr.vmem [resolvable:$true] %s70
      %76 = dma.hbm_to_vmem [thread:$0]  %s5, 512, %s71, [#allocation9], 128, 128, 8
    $region25: #{tpu_custom_call.1} parent=1 // pred_fallthru
      _
    // Predicated region
    $region26: #{tpu_custom_call.1} parent=1 // pred_check
      _
    $region27: #{tpu_custom_call.1} parent=1 // pred_check_branch
      %78 = sbr.rel (0) target = $region29
    $region28: #{tpu_custom_call.1} parent=1 // pred_region
      %s80 = ssub.s32 512, 512
      %81 = vsyncadd [#allocation9], %s80
      %s82 = sshll.u32 [#allocation10], 4
      %s83 = int_to_ptr.vmem [resolvable:$true] %s82
      %88 = dma.hbm_to_vmem [thread:$0]  %s6, 512, %s83, [#allocation9], 128, 128, 8
    $region29: #{tpu_custom_call.1} parent=1 // pred_fallthru
      _
    // Predicated region
    $region30: #{tpu_custom_call.1} parent=1 // pred_check
      _
    $region31: #{tpu_custom_call.1} parent=1 // pred_check_branch
      %90 = sbr.rel (0) target = $region33
    $region32: #{tpu_custom_call.1} parent=1 // pred_region
      _
    $region33: #{tpu_custom_call.1} parent=1 // pred_fallthru
      _
    // Predicated region
    $region34: #{tpu_custom_call.1} parent=1 // pred_check
      _
    $region35: #{tpu_custom_call.1} parent=1 // pred_check_branch
      %92 = sbr.rel (0) target = $region37
    $region36: #{tpu_custom_call.1} parent=1 // pred_region
      _
    $region37: #{tpu_custom_call.1} parent=1 // pred_fallthru
      _
    // Predicated region
    $region38: #{tpu_custom_call.1} parent=1 // pred_check
      _
    $region39: #{tpu_custom_call.1} parent=1 // pred_check_branch
      %94 = sbr.rel (0) target = $region41
    $region40: #{tpu_custom_call.1} parent=1 // pred_region
      _
    $region41: #{tpu_custom_call.1} parent=1 // pred_fallthru
      _
    // Predicated region
    $region42: #{tpu_custom_call.1} parent=1 // pred_check
      _
    $region43: #{tpu_custom_call.1} parent=1 // pred_check_branch
      %96 = sbr.rel (0) target = $region45
    $region44: #{tpu_custom_call.1} parent=1 // pred_region
      _
    $region45: #{tpu_custom_call.1} parent=1 // pred_fallthru
      _
    // Predicated region
    $region46: #{tpu_custom_call.1} parent=1 // pred_check
      _
    $region47: #{tpu_custom_call.1} parent=1 // pred_check_branch
      %98 = sbr.rel (0) target = $region49
    $region48: #{tpu_custom_call.1} parent=1 // pred_region
      %99 = dma.done [#allocation3], 256
    $region49: #{tpu_custom_call.1} parent=1 // pred_fallthru
      _
    // Predicated region
    $region50: #{tpu_custom_call.1} parent=1 // pred_check
      _
    $region51: #{tpu_custom_call.1} parent=1 // pred_check_branch
      %101 = sbr.rel (0) target = $region53
    $region52: #{tpu_custom_call.1} parent=1 // pred_region
      %102 = dma.done [#allocation6], 256
    $region53: #{tpu_custom_call.1} parent=1 // pred_fallthru
      _
    // Predicated region
    $region54: #{tpu_custom_call.1} parent=1 // pred_check
      _
    $region55: #{tpu_custom_call.1} parent=1 // pred_check_branch
      %104 = sbr.rel (0) target = $region57
    $region56: #{tpu_custom_call.1} parent=1 // pred_region
      %105 = dma.done [#allocation6], 256
    $region57: #{tpu_custom_call.1} parent=1 // pred_fallthru
      _
    // Predicated region
    $region58: #{tpu_custom_call.1} parent=1 // pred_check
      _
    $region59: #{tpu_custom_call.1} parent=1 // pred_check_branch
      %107 = sbr.rel (0) target = $region61
    $region60: #{tpu_custom_call.1} parent=1 // pred_region
      %108 = dma.done [#allocation9], 512
    $region61: #{tpu_custom_call.1} parent=1 // pred_fallthru
      _
    // Predicated region
    $region62: #{tpu_custom_call.1} parent=1 // pred_check
      _
    $region63: #{tpu_custom_call.1} parent=1 // pred_check_branch
      %110 = sbr.rel (0) target = $region65
    $region64: #{tpu_custom_call.1} parent=1 // pred_region
      %111 = dma.done [#allocation9], 512
    $region65: #{tpu_custom_call.1} parent=1 // pred_fallthru
      _
    %v112 = vld [vmem:[#allocation2] sm:$0xff]
    %v113 = vld [vmem:[#allocation2 + $0x8] sm:$0xff]
    %v114 = vld [vmem:[%s3] sm:$0xff]
    %v115 = vld [vmem:[%s3 + $0x8] sm:$0xff]
    %v116 = vld [vmem:[%s3 + $0x10] sm:$0xff]
    %v117 = vld [vmem:[%s3 + $0x18] sm:$0xff]
    %v118 = vld [vmem:[%s7] sm:$0x1]
    %v120 = vlaneseq
    %v121 = vshrl.u32 %v120, 7
    %v122 = vsub.s32 0, %v121
    %v123 = vrot.slane %v118, %v122
    %vm125 = vcmask 261120
    %v127 = vsel %vm125, %v112, 0
    %v130 = vsel %vm125, %v113, 0
    %132 = vmatprep.subr.mxu0 0.0
    %133 = vmatpush1.msra.mxu0 %v114
    %134 = vmatprep.subr.mxu0 0.0
    %135 = vmatpush1.msra.mxu0 %v115
    %136 = vmatprep.subr.mxu0 0.0
    %137 = vmatpush1.msra.mxu0 %v116
    %138 = vmatprep.subr.mxu0 0.0
    %139 = vmatpush1.msra.mxu0 %v117
    %140 = vmatprep.subr.mxu0 0.0
    %141 = vmatpush1.msra.mxu0 0.0
    %142 = vmatprep.subr.mxu0 0.0
    %143 = vmatpush1.msra.mxu0 0.0
    %144 = vmatprep.subr.mxu0 0.0
    %145 = vmatpush1.msra.mxu0 0.0
    %146 = vmatprep.subr.mxu0 0.0
    %147 = vmatpush1.msra.mxu0 0.0
    %148 = vmatprep.subr.mxu0 0.0
    %149 = vmatpush1.msra.mxu0 0.0
    %150 = vmatprep.subr.mxu0 0.0
    %151 = vmatpush1.msra.mxu0 0.0
    %152 = vmatprep.subr.mxu0 0.0
    %153 = vmatpush1.msra.mxu0 0.0
    %154 = vmatprep.subr.mxu0 0.0
    %155 = vmatpush1.msra.mxu0 0.0
    %156 = vmatprep.subr.mxu0 0.0
    %157 = vmatpush1.msra.mxu0 0.0
    %158 = vmatprep.subr.mxu0 0.0
    %159 = vmatpush1.msra.mxu0 0.0
    %160 = vmatprep.subr.mxu0 0.0
    %161 = vmatpush1.msra.mxu0 0.0
    %162 = vmatprep.subr.mxu0 0.0
    %163 = vmatpush1.msra.mxu0 0.0
    %164 = vmatprep.subr.mxu0 0.0
    %165 = vmatpush1.msra.mxu0 0.0
    %166 = vmatprep.subr.mxu0 0.0
    %167 = vmatpush1.msra.mxu0 0.0
    %168 = vmatprep.subr.mxu0 0.0
    %169 = vmatpush1.msra.mxu0 0.0
    %170 = vmatprep.subr.mxu0 0.0
    %171 = vmatpush1.msra.mxu0 0.0
    %172 = vmatprep.subr.mxu0 0.0
    %173 = vmatpush1.msra.mxu0 0.0
    %174 = vmatprep.subr.mxu0 0.0
    %175 = vmatpush1.msra.mxu0 0.0
    %176 = vmatprep.subr.mxu0 0.0
    %177 = vmatpush1.msra.mxu0 0.0
    %178 = vmatprep.subr.mxu0 0.0
    %179 = vmatpush1.msra.mxu0 0.0
    %180 = vmatprep.subr.mxu0 0.0
    %181 = vmatpush1.msra.mxu0 0.0
    %182 = vmatprep.subr.mxu0 0.0
    %183 = vmatpush1.msra.mxu0 0.0
    %184 = vmatprep.subr.mxu0 0.0
    %185 = vmatpush1.msra.mxu0 0.0
    %186 = vmatprep.subr.mxu0 0.0
    %187 = vmatpush1.msra.mxu0 0.0
    %188 = vmatprep.subr.mxu0 0.0
    %189 = vmatpush1.msra.mxu0 0.0
    %190 = vmatprep.subr.mxu0 0.0
    %191 = vmatpush1.msra.mxu0 0.0
    %192 = vmatprep.subr.mxu0 0.0
    %193 = vmatpush1.msra.mxu0 0.0
    %194 = vmatprep.subr.mxu0 0.0
    %195 = vmatpush1.msra.mxu0 0.0
    %196 = vmatprep.mubr.f32.mxu0 0.0
    %197 = vmatmul.mubr.f32.gmra.mrb[0].mxu0 %v127
    %v198 = vpop.f32.mrb[0].mxu0
    %v199 = vadd.f32 %v123, %v198
    %v200 = vpop.f32.mrb[0].mxu0
    %201 = vmatprep.mubr.f32.mxu0 0.0
    %202 = vmatmul.mubr.f32.gmra.mrb[0].mxu0 %v130
    %v203 = vpop.f32.mrb[0].mxu0
    %v204 = vadd.f32 %v123, %v203
    %v205 = vpop.f32.mrb[0].mxu0
    %206 = vdwg.mxu0
    %207 = vst.msk [vmem:[#allocation11] sm:$0xff] %vm125, %v199
    %208 = vst.msk [vmem:[#allocation11 + $0x8] sm:$0xff] %vm125, %v204
    %v209 = vld [vmem:[%s4] sm:$0xff]
    %v210 = vld [vmem:[%s4 + $0x8] sm:$0xff]
    %v211 = vld [vmem:[%s4 + $0x10] sm:$0xff]
    %v212 = vld [vmem:[%s4 + $0x18] sm:$0xff]
    %v213 = vld [vmem:[%s8] sm:$0x1]
    %v215 = vlaneseq
    %v216 = vshrl.u32 %v215, 7
    %v217 = vsub.s32 0, %v216
    %v218 = vrot.slane %v213, %v217
    %220 = vmatprep.subr.mxu0 0.0
    %221 = vmatpush1.msra.mxu0 %v209
    %222 = vmatprep.subr.mxu0 0.0
    %223 = vmatpush1.msra.mxu0 %v210
    %224 = vmatprep.subr.mxu0 0.0
    %225 = vmatpush1.msra.mxu0 %v211
    %226 = vmatprep.subr.mxu0 0.0
    %227 = vmatpush1.msra.mxu0 %v212
    %228 = vmatprep.subr.mxu0 0.0
    %229 = vmatpush1.msra.mxu0 0.0
    %230 = vmatprep.subr.mxu0 0.0
    %231 = vmatpush1.msra.mxu0 0.0
    %232 = vmatprep.subr.mxu0 0.0
    %233 = vmatpush1.msra.mxu0 0.0
    %234 = vmatprep.subr.mxu0 0.0
    %235 = vmatpush1.msra.mxu0 0.0
    %236 = vmatprep.subr.mxu0 0.0
    %237 = vmatpush1.msra.mxu0 0.0
    %238 = vmatprep.subr.mxu0 0.0
    %239 = vmatpush1.msra.mxu0 0.0
    %240 = vmatprep.subr.mxu0 0.0
    %241 = vmatpush1.msra.mxu0 0.0
    %242 = vmatprep.subr.mxu0 0.0
    %243 = vmatpush1.msra.mxu0 0.0
    %244 = vmatprep.subr.mxu0 0.0
    %245 = vmatpush1.msra.mxu0 0.0
    %246 = vmatprep.subr.mxu0 0.0
    %247 = vmatpush1.msra.mxu0 0.0
    %248 = vmatprep.subr.mxu0 0.0
    %249 = vmatpush1.msra.mxu0 0.0
    %250 = vmatprep.subr.mxu0 0.0
    %251 = vmatpush1.msra.mxu0 0.0
    %252 = vmatprep.subr.mxu0 0.0
    %253 = vmatpush1.msra.mxu0 0.0
    %254 = vmatprep.subr.mxu0 0.0
    %255 = vmatpush1.msra.mxu0 0.0
    %256 = vmatprep.subr.mxu0 0.0
    %257 = vmatpush1.msra.mxu0 0.0
    %258 = vmatprep.subr.mxu0 0.0
    %259 = vmatpush1.msra.mxu0 0.0
    %260 = vmatprep.subr.mxu0 0.0
    %261 = vmatpush1.msra.mxu0 0.0
    %262 = vmatprep.subr.mxu0 0.0
    %263 = vmatpush1.msra.mxu0 0.0
    %264 = vmatprep.subr.mxu0 0.0
    %265 = vmatpush1.msra.mxu0 0.0
    %266 = vmatprep.subr.mxu0 0.0
    %267 = vmatpush1.msra.mxu0 0.0
    %268 = vmatprep.subr.mxu0 0.0
    %269 = vmatpush1.msra.mxu0 0.0
    %270 = vmatprep.subr.mxu0 0.0
    %271 = vmatpush1.msra.mxu0 0.0
    %272 = vmatprep.subr.mxu0 0.0
    %273 = vmatpush1.msra.mxu0 0.0
    %274 = vmatprep.subr.mxu0 0.0
    %275 = vmatpush1.msra.mxu0 0.0
    %276 = vmatprep.subr.mxu0 0.0
    %277 = vmatpush1.msra.mxu0 0.0
    %278 = vmatprep.subr.mxu0 0.0
    %279 = vmatpush1.msra.mxu0 0.0
    %280 = vmatprep.subr.mxu0 0.0
    %281 = vmatpush1.msra.mxu0 0.0
    %282 = vmatprep.subr.mxu0 0.0
    %283 = vmatpush1.msra.mxu0 0.0
    %284 = vmatprep.mubr.f32.mxu0 0.0
    %285 = vmatmul.mubr.f32.gmra.mrb[0].mxu0 %v127
    %v286 = vpop.f32.mrb[0].mxu0
    %v287 = vadd.f32 %v218, %v286
    %v288 = vpop.f32.mrb[0].mxu0
    %289 = vmatprep.mubr.f32.mxu0 0.0
    %290 = vmatmul.mubr.f32.gmra.mrb[0].mxu0 %v130
    %v291 = vpop.f32.mrb[0].mxu0
    %v292 = vadd.f32 %v218, %v291
    %v293 = vpop.f32.mrb[0].mxu0
    %294 = vdwg.mxu0
    %vm295 = vcmask 15360
    %296 = vst.msk [vmem:[%s12] sm:$0xff] %vm295, %v287
    %297 = vst.msk [vmem:[%s12 + $0x8] sm:$0xff] %vm295, %v292
    %v298 = vld [vmem:[#allocation5] sm:$0xff]
    %v299 = vld [vmem:[#allocation5 + $0x8] sm:$0xff]
    %v300 = vld [vmem:[#allocation8] sm:$0xff]
    %v301 = vld [vmem:[#allocation8 + $0x8] sm:$0xff]
    %v302 = vld [vmem:[#allocation8 + $0x10] sm:$0xff]
    %v303 = vld [vmem:[#allocation8 + $0x18] sm:$0xff]
    %v304 = vld [vmem:[%s9] sm:$0x1]
    %v306 = vlaneseq
    %v307 = vshrl.u32 %v306, 7
    %v308 = vsub.s32 0, %v307
    %v309 = vrot.slane %v304, %v308
    %v312 = vsel %vm125, %v298, 0
    %v315 = vsel %vm125, %v299, 0
    %317 = vmatprep.subr.mxu0 0.0
    %318 = vmatpush1.msra.mxu0 %v300
    %319 = vmatprep.subr.mxu0 0.0
    %320 = vmatpush1.msra.mxu0 %v301
    %321 = vmatprep.subr.mxu0 0.0
    %322 = vmatpush1.msra.mxu0 %v302
    %323 = vmatprep.subr.mxu0 0.0
    %324 = vmatpush1.msra.mxu0 %v303
    %325 = vmatprep.subr.mxu0 0.0
    %326 = vmatpush1.msra.mxu0 0.0
    %327 = vmatprep.subr.mxu0 0.0
    %328 = vmatpush1.msra.mxu0 0.0
    %329 = vmatprep.subr.mxu0 0.0
    %330 = vmatpush1.msra.mxu0 0.0
    %331 = vmatprep.subr.mxu0 0.0
    %332 = vmatpush1.msra.mxu0 0.0
    %333 = vmatprep.subr.mxu0 0.0
    %334 = vmatpush1.msra.mxu0 0.0
    %335 = vmatprep.subr.mxu0 0.0
    %336 = vmatpush1.msra.mxu0 0.0
    %337 = vmatprep.subr.mxu0 0.0
    %338 = vmatpush1.msra.mxu0 0.0
    %339 = vmatprep.subr.mxu0 0.0
    %340 = vmatpush1.msra.mxu0 0.0
    %341 = vmatprep.subr.mxu0 0.0
    %342 = vmatpush1.msra.mxu0 0.0
    %343 = vmatprep.subr.mxu0 0.0
    %344 = vmatpush1.msra.mxu0 0.0
    %345 = vmatprep.subr.mxu0 0.0
    %346 = vmatpush1.msra.mxu0 0.0
    %347 = vmatprep.subr.mxu0 0.0
    %348 = vmatpush1.msra.mxu0 0.0
    %349 = vmatprep.subr.mxu0 0.0
    %350 = vmatpush1.msra.mxu0 0.0
    %351 = vmatprep.subr.mxu0 0.0
    %352 = vmatpush1.msra.mxu0 0.0
    %353 = vmatprep.subr.mxu0 0.0
    %354 = vmatpush1.msra.mxu0 0.0
    %355 = vmatprep.subr.mxu0 0.0
    %356 = vmatpush1.msra.mxu0 0.0
    %357 = vmatprep.subr.mxu0 0.0
    %358 = vmatpush1.msra.mxu0 0.0
    %359 = vmatprep.subr.mxu0 0.0
    %360 = vmatpush1.msra.mxu0 0.0
    %361 = vmatprep.subr.mxu0 0.0
    %362 = vmatpush1.msra.mxu0 0.0
    %363 = vmatprep.subr.mxu0 0.0
    %364 = vmatpush1.msra.mxu0 0.0
    %365 = vmatprep.subr.mxu0 0.0
    %366 = vmatpush1.msra.mxu0 0.0
    %367 = vmatprep.subr.mxu0 0.0
    %368 = vmatpush1.msra.mxu0 0.0
    %369 = vmatprep.subr.mxu0 0.0
    %370 = vmatpush1.msra.mxu0 0.0
    %371 = vmatprep.subr.mxu0 0.0
    %372 = vmatpush1.msra.mxu0 0.0
    %373 = vmatprep.subr.mxu0 0.0
    %374 = vmatpush1.msra.mxu0 0.0
    %375 = vmatprep.subr.mxu0 0.0
    %376 = vmatpush1.msra.mxu0 0.0
    %377 = vmatprep.subr.mxu0 0.0
    %378 = vmatpush1.msra.mxu0 0.0
    %379 = vmatprep.subr.mxu0 0.0
    %380 = vmatpush1.msra.mxu0 0.0
    %381 = vmatprep.mubr.f32.mxu0 0.0
    %382 = vmatmul.mubr.f32.gmra.mrb[0].mxu0 %v312
    %v383 = vpop.f32.mrb[0].mxu0
    %v384 = vadd.f32 %v309, %v383
    %v385 = vpop.f32.mrb[0].mxu0
    %386 = vmatprep.mubr.f32.mxu0 0.0
    %387 = vmatmul.mubr.f32.gmra.mrb[0].mxu0 %v315
    %v388 = vpop.f32.mrb[0].mxu0
    %v389 = vadd.f32 %v309, %v388
    %v390 = vpop.f32.mrb[0].mxu0
    %391 = vdwg.mxu0
    %392 = vst.msk [vmem:[#allocation12] sm:$0xff] %vm125, %v384
    %393 = vst.msk [vmem:[#allocation12 + $0x8] sm:$0xff] %vm125, %v389
    %v394 = vld [vmem:[#allocation7] sm:$0xff]
    %v395 = vld [vmem:[#allocation7 + $0x8] sm:$0xff]
    %v396 = vld [vmem:[#allocation10] sm:$0xff]
    %v397 = vld [vmem:[#allocation10 + $0x8] sm:$0xff]
    %v398 = vld [vmem:[#allocation10 + $0x10] sm:$0xff]
    %v399 = vld [vmem:[#allocation10 + $0x18] sm:$0xff]
    %v400 = vld [vmem:[%s10] sm:$0x1]
    %v402 = vlaneseq
    %v403 = vshrl.u32 %v402, 7
    %v404 = vsub.s32 0, %v403
    %v405 = vrot.slane %v400, %v404
    %v408 = vsel %vm125, %v394, 0
    %v411 = vsel %vm125, %v395, 0
    %413 = vmatprep.subr.mxu0 0.0
    %414 = vmatpush1.msra.mxu0 %v396
    %415 = vmatprep.subr.mxu0 0.0
    %416 = vmatpush1.msra.mxu0 %v397
    %417 = vmatprep.subr.mxu0 0.0
    %418 = vmatpush1.msra.mxu0 %v398
    %419 = vmatprep.subr.mxu0 0.0
    %420 = vmatpush1.msra.mxu0 %v399
    %421 = vmatprep.subr.mxu0 0.0
    %422 = vmatpush1.msra.mxu0 0.0
    %423 = vmatprep.subr.mxu0 0.0
    %424 = vmatpush1.msra.mxu0 0.0
    %425 = vmatprep.subr.mxu0 0.0
    %426 = vmatpush1.msra.mxu0 0.0
    %427 = vmatprep.subr.mxu0 0.0
    %428 = vmatpush1.msra.mxu0 0.0
    %429 = vmatprep.subr.mxu0 0.0
    %430 = vmatpush1.msra.mxu0 0.0
    %431 = vmatprep.subr.mxu0 0.0
    %432 = vmatpush1.msra.mxu0 0.0
    %433 = vmatprep.subr.mxu0 0.0
    %434 = vmatpush1.msra.mxu0 0.0
    %435 = vmatprep.subr.mxu0 0.0
    %436 = vmatpush1.msra.mxu0 0.0
    %437 = vmatprep.subr.mxu0 0.0
    %438 = vmatpush1.msra.mxu0 0.0
    %439 = vmatprep.subr.mxu0 0.0
    %440 = vmatpush1.msra.mxu0 0.0
    %441 = vmatprep.subr.mxu0 0.0
    %442 = vmatpush1.msra.mxu0 0.0
    %443 = vmatprep.subr.mxu0 0.0
    %444 = vmatpush1.msra.mxu0 0.0
    %445 = vmatprep.subr.mxu0 0.0
    %446 = vmatpush1.msra.mxu0 0.0
    %447 = vmatprep.subr.mxu0 0.0
    %448 = vmatpush1.msra.mxu0 0.0
    %449 = vmatprep.subr.mxu0 0.0
    %450 = vmatpush1.msra.mxu0 0.0
    %451 = vmatprep.subr.mxu0 0.0
    %452 = vmatpush1.msra.mxu0 0.0
    %453 = vmatprep.subr.mxu0 0.0
    %454 = vmatpush1.msra.mxu0 0.0
    %455 = vmatprep.subr.mxu0 0.0
    %456 = vmatpush1.msra.mxu0 0.0
    %457 = vmatprep.subr.mxu0 0.0
    %458 = vmatpush1.msra.mxu0 0.0
    %459 = vmatprep.subr.mxu0 0.0
    %460 = vmatpush1.msra.mxu0 0.0
    %461 = vmatprep.subr.mxu0 0.0
    %462 = vmatpush1.msra.mxu0 0.0
    %463 = vmatprep.subr.mxu0 0.0
    %464 = vmatpush1.msra.mxu0 0.0
    %465 = vmatprep.subr.mxu0 0.0
    %466 = vmatpush1.msra.mxu0 0.0
    %467 = vmatprep.subr.mxu0 0.0
    %468 = vmatpush1.msra.mxu0 0.0
    %469 = vmatprep.subr.mxu0 0.0
    %470 = vmatpush1.msra.mxu0 0.0
    %471 = vmatprep.subr.mxu0 0.0
    %472 = vmatpush1.msra.mxu0 0.0
    %473 = vmatprep.subr.mxu0 0.0
    %474 = vmatpush1.msra.mxu0 0.0
    %475 = vmatprep.subr.mxu0 0.0
    %476 = vmatpush1.msra.mxu0 0.0
    %477 = vmatprep.mubr.f32.mxu0 0.0
    %478 = vmatmul.mubr.f32.gmra.mrb[0].mxu0 %v408
    %v479 = vpop.f32.mrb[0].mxu0
    %v480 = vadd.f32 %v405, %v479
    %v481 = vpop.f32.mrb[0].mxu0
    %482 = vmatprep.mubr.f32.mxu0 0.0
    %483 = vmatmul.mubr.f32.gmra.mrb[0].mxu0 %v411
    %v484 = vpop.f32.mrb[0].mxu0
    %v485 = vadd.f32 %v405, %v484
    %v486 = vpop.f32.mrb[0].mxu0
    %487 = vdwg.mxu0
    %488 = vst.msk [vmem:[#allocation14] sm:$0xff] %vm125, %v480
    %489 = vst.msk [vmem:[#allocation14 + $0x8] sm:$0xff] %vm125, %v485
    // Predicated region
    $region66: #{tpu_custom_call.1} parent=1 // pred_check
      _
    $region67: #{tpu_custom_call.1} parent=1 // pred_check_branch
      %491 = sbr.rel (0) target = $region69
    $region68: #{tpu_custom_call.1} parent=1 // pred_region
      %s493 = ssub.s32 256, 256
      %494 = vsyncadd [#allocation4], %s493
      %s495 = sshll.u32 [#allocation11], 4
      %s496 = int_to_ptr.vmem [resolvable:$true] %s495
      %501 = dma.vmem_to_hbm [thread:$0]  %s496, 256, %s11, [#allocation4], 128, 128, 8
    $region69: #{tpu_custom_call.1} parent=1 // pred_fallthru
      _
    // Predicated region
    $region70: #{tpu_custom_call.1} parent=1 // pred_check
      _
    $region71: #{tpu_custom_call.1} parent=1 // pred_check_branch
      %503 = sbr.rel (0) target = $region73
    $region72: #{tpu_custom_call.1} parent=1 // pred_region
      _
    $region73: #{tpu_custom_call.1} parent=1 // pred_fallthru
      _
    // Predicated region
    $region74: #{tpu_custom_call.1} parent=1 // pred_check
      _
    $region75: #{tpu_custom_call.1} parent=1 // pred_check_branch
      %505 = sbr.rel (0) target = $region77
    $region76: #{tpu_custom_call.1} parent=1 // pred_region
      %s507 = ssub.s32 256, 256
      %508 = vsyncadd [#allocation13], %s507
      %s509 = sshll.u32 [#allocation12], 4
      %s510 = int_to_ptr.vmem [resolvable:$true] %s509
      %515 = dma.vmem_to_hbm [thread:$0]  %s510, 256, %s13, [#allocation13], 128, 128, 8
    $region77: #{tpu_custom_call.1} parent=1 // pred_fallthru
      _
    // Predicated region
    $region78: #{tpu_custom_call.1} parent=1 // pred_check
      _
    $region79: #{tpu_custom_call.1} parent=1 // pred_check_branch
      %517 = sbr.rel (0) target = $region81
    $region80: #{tpu_custom_call.1} parent=1 // pred_region
      %s519 = ssub.s32 256, 256
      %520 = vsyncadd [#allocation13], %s519
      %s521 = sshll.u32 [#allocation14], 4
      %s522 = int_to_ptr.vmem [resolvable:$true] %s521
      %527 = dma.vmem_to_hbm [thread:$0]  %s522, 256, %s14, [#allocation13], 128, 128, 8
    $region81: #{tpu_custom_call.1} parent=1 // pred_fallthru
      _
    // Predicated region
    $region82: #{tpu_custom_call.1} parent=1 // pred_check
      _
    $region83: #{tpu_custom_call.1} parent=1 // pred_check_branch
      %529 = sbr.rel (0) target = $region85
    $region84: #{tpu_custom_call.1} parent=1 // pred_region
      %530 = dma.done [#allocation4], 256
    $region85: #{tpu_custom_call.1} parent=1 // pred_fallthru
      _
    // Predicated region
    $region86: #{tpu_custom_call.1} parent=1 // pred_check
      _
    $region87: #{tpu_custom_call.1} parent=1 // pred_check_branch
      %532 = sbr.rel (0) target = $region89
    $region88: #{tpu_custom_call.1} parent=1 // pred_region
      _
    $region89: #{tpu_custom_call.1} parent=1 // pred_fallthru
      _
    // Predicated region
    $region90: #{tpu_custom_call.1} parent=1 // pred_check
      _
    $region91: #{tpu_custom_call.1} parent=1 // pred_check_branch
      %534 = sbr.rel (0) target = $region93
    $region92: #{tpu_custom_call.1} parent=1 // pred_region
      %535 = dma.done [#allocation13], 256
    $region93: #{tpu_custom_call.1} parent=1 // pred_fallthru
      _
    // Predicated region
    $region94: #{tpu_custom_call.1} parent=1 // pred_check
      _
    $region95: #{tpu_custom_call.1} parent=1 // pred_check_branch
      %537 = sbr.rel (0) target = $region97
    $region96: #{tpu_custom_call.1} parent=1 // pred_region
      %538 = dma.done [#allocation13], 256
    $region97: #{tpu_custom_call.1} parent=1 // pred_fallthru
      _
    %539 = vsyncpa [#allocation3], 1
    %540 = vsyncpa [#allocation6], 1
    %541 = vsyncpa [#allocation9], 1
    %542 = vsyncpa [#allocation4], 1
    %543 = vsyncpa [#allocation13], 1

</llo_original>
